<compile_context>
chip_gen: v7x
topology: tpu7x:2x2x1
jax: 0.10.0
libtpu: 0.0.40
codegen_flags: <defaults>
</compile_context>

<pallas_src>
import math
import jax
import jax.numpy as jnp
from jax.experimental import pallas as pl
from jax.experimental.pallas import tpu as pltpu


def _round_up(x, m):
    return ((x + m - 1) // m) * m


def _vmem_capacity_bytes():
    try:
        return int(pltpu.get_tpu_info().vmem_capacity_bytes)
    except Exception:
        return 64 << 20  # conservative fallback (v7x per-TensorCore VMEM)


def _make_kernel(n_tok, dst_mxlen, t_h, width, use_softmax, mxu_dtype):
    scale = -1.0 / math.sqrt(width)
    t_hw = t_h * width
    mt = dst_mxlen * n_tok

    def kernel(g_ref, mb_ref, s_ref, q_ref, k_ref, vf_ref, vb_ref, vo_ref):
        # g_ref  : [dst_mxlen, n_tok, n_tok] (mxu dtype) one-hot g[slot, dst, src], VMEM-resident
        # mb_ref : [dst_mxlen, n_tok]   additive -1e12 bias (softmax) or 0/1 mask (no softmax)
        # s_ref  : [t_hw, t_h]          block-ones head reduce/broadcast matrix
        # q/k/vf/vb_ref : [1, n_tok, t_hw]   one (batch, head-group) tile, lane-dense
        gmat = g_ref[...].reshape(mt, n_tok)            # feeds the MXU directly, no upcast
        s = s_ref[...]
        mb = mb_ref[...]

        # ---------- score path (kk / ad die before the value path starts) ----------
        kk = jnp.dot(gmat, k_ref[0].astype(mxu_dtype),
                     preferred_element_type=jnp.float32)                    # [mt, t_hw]
        q = q_ref[0].astype(jnp.float32)
        ad = jnp.abs(kk.reshape(dst_mxlen, n_tok, t_hw) - q[None]).reshape(mt, t_hw)
        ww = (jnp.dot(ad, s, preferred_element_type=jnp.float32) * scale
              ).reshape(dst_mxlen, n_tok, t_h)                              # [slot, dst, h]

        if use_softmax:
            ww = ww + mb[:, :, None]                 # -1e12 on missing slots (precomputed)
            mmax = jnp.max(ww, axis=0, keepdims=True)
            e = jnp.exp(ww - mmax)
            denom = jnp.sum(e, axis=0, keepdims=True)
            attn = e * pl.reciprocal(denom, approx=True)   # EUP vrcp — free slot
        else:
            attn = ww * mb[:, :, None]               # multiplicative 0/1 mask

        # broadcast per-head attn across that head's width lanes via S^T (MXU)
        attn_hw = jax.lax.dot_general(
            attn.reshape(mt, t_h), s, (((1,), (1,)), ((), ())),
            preferred_element_type=jnp.float32)                             # [mt, t_hw]

        # ---------- forward: vo[dst] += attn * vf[src]  (weighted sum over slots) ----------
        vfg = jnp.dot(gmat, vf_ref[0].astype(mxu_dtype),
                      preferred_element_type=jnp.float32)                   # [mt, t_hw]
        vo_f = jnp.sum((attn_hw * vfg).reshape(dst_mxlen, n_tok, t_hw), axis=0)

        # ---------- backward: vo[src] += attn * vb[dst]  (transposed-G contraction) ----------
        wb = (attn_hw.reshape(dst_mxlen, n_tok, t_hw)
              * vb_ref[0].astype(jnp.float32)[None]).reshape(mt, t_hw)
        vo_b = jax.lax.dot_general(
            gmat, wb.astype(mxu_dtype), (((0,), (0,)), ((), ())),
            preferred_element_type=jnp.float32)                             # [n_tok, t_hw]

        vo_ref[0] = (vo_f + vo_b).astype(vo_ref.dtype)

    return kernel


def build_connectivity(coo, n_tok, dst_mxlen, use_softmax, mxu_dtype):
    """Dense one-hot gather tensor + slot bias/mask.

    This is an O(dst_mxlen * n_tok^2) scatter: hoist/cache the result when the same coo
    is reused across many forward calls instead of rebuilding it per call.
    """
    coo = jnp.asarray(coo, dtype=jnp.int32)
    g = jnp.zeros((dst_mxlen, n_tok, n_tok), mxu_dtype)
    g = g.at[coo[:, 2], coo[:, 0], coo[:, 1]].set(1)          # g[slot, dst, src] = 1
    mask = jnp.zeros((dst_mxlen, n_tok), jnp.float32)
    mask = mask.at[coo[:, 2], coo[:, 0]].set(1.0)
    mb = (mask - 1.0) * 1e12 if use_softmax else mask          # additive bias / mult mask
    return g, mb


def l1attn_sparse_bidi(vf, vb, q, k, coo, dst_mxlen, use_softmax=True,
                       mxu_dtype=None, head_tile=None, connectivity=None):
    bs, n_tok, n_heads, width = q.shape
    if mxu_dtype is None:
        # bf16 MXU for bf16-class inputs (gather stays exact); keep strict f32 parity otherwise.
        mxu_dtype = jnp.bfloat16 if jnp.dtype(q.dtype).itemsize <= 2 else jnp.float32
    mxu_dtype = jnp.dtype(mxu_dtype)

    # ---- pad heads so the folded feature axis hw is lane-dense (multiple of 128) and
    #      tokens to a sublane multiple of 8 (keeps in-kernel reshapes as free views) ----
    h_quant = 128 // math.gcd(width, 128)
    n_heads_p = _round_up(n_heads, h_quant)
    if (n_heads_p - n_heads) > n_heads:      # pathological widths: don't more-than-double work
        n_heads_p = n_heads
    n_tok_p = _round_up(n_tok, 8)
    hw_p = n_heads_p * width

    def pad_fold(x):  # native dtype, zero-pad, free (heads,width)->hw fold
        x = jnp.pad(x, ((0, 0), (0, n_tok_p - n_tok), (0, n_heads_p - n_heads), (0, 0)))
        return x.reshape(bs, n_tok_p, hw_p)

    q2, k2, vf2, vb2 = map(pad_fold, (q, k, vf, vb))

    if connectivity is None:
        connectivity = build_connectivity(coo, n_tok_p, dst_mxlen, use_softmax, mxu_dtype)
    g, mb = connectivity

    # ---- generation-aware VMEM budget ----
    cap = _vmem_capacity_bytes()
    vmem_limit = min(int(cap * 0.85), 120 << 20)
    resident = g.size * mxu_dtype.itemsize + mb.size * 4 + hw_p * n_heads_p * 4

    # ---- head-group tiling: the [dst_mxlen*n_tok, t_hw] f32 intermediates are what blow
    #      VMEM at realistic sizes; a second "parallel" axis also feeds v7x's two cores ----
    itemsize = jnp.dtype(q.dtype).itemsize
    if head_tile is None:
        if (n_heads_p * width) % 128 == 0:
            cands = [t for t in range(h_quant, n_heads_p + 1, h_quant) if n_heads_p % t == 0]
        else:
            cands = [n_heads_p]              # full-dim block is always layout-legal
        budget = vmem_limit - resident - (4 << 20)
        head_tile = cands[0]
        mt = dst_mxlen * n_tok_p
        for t in cands:
            per = (2 * 5 * n_tok_p * t * width * max(itemsize, 4)   # pipelined token tiles
                   + 4 * mt * t * width * 4)                        # live f32 intermediates
            if per <= budget:
                head_tile = t
    t_h = head_tile
    t_hw = t_h * width
    n_hgrp = n_heads_p // t_h

    s = jnp.repeat(jnp.eye(t_h, dtype=jnp.float32), width, axis=0)   # [t_hw, t_h]

    kernel = _make_kernel(n_tok_p, dst_mxlen, t_h, width, use_softmax, mxu_dtype)

    tok_spec = pl.BlockSpec((1, n_tok_p, t_hw), lambda b, h: (b, 0, h))
    # Grid-invariant operands: whole-array VMEM residents (no per-step double buffering).
    resident_spec = pl.BlockSpec(memory_space=pltpu.MemorySpace.VMEM)

    vo2 = pl.pallas_call(
        kernel,
        out_shape=jax.ShapeDtypeStruct((bs, n_tok_p, hw_p), q.dtype),
        grid=(bs, n_hgrp),
        in_specs=[resident_spec, resident_spec, resident_spec,
                  tok_spec, tok_spec, tok_spec, tok_spec],
        out_specs=tok_spec,
        compiler_params=pltpu.CompilerParams(
            dimension_semantics=("parallel", "parallel"),
            vmem_limit_bytes=vmem_limit),
    )(g, mb, s, q2, k2, vf2, vb2)

    vo = vo2.reshape(bs, n_tok_p, n_heads_p, width)[:, :n_tok, :n_heads, :]
    return vo


def _reference(vf, vb, q, k, coo, dst_mxlen, use_softmax):
    """Pure-JAX dense reference mirroring the PyTorch module's semantics (f32 math)."""
    bs, n_tok, n_heads, width = q.shape
    q, k, vf, vb = (x.astype(jnp.float32) for x in (q, k, vf, vb))
    scale = -1.0 / math.sqrt(width)
    qq = q[:, coo[:, 0]]                         # [bs, cl, h, w]
    kk = k[:, coo[:, 1]]
    ww = jnp.sum(jnp.abs(qq - kk), -1) * scale   # [bs, cl, h]
    if use_softmax:
        attn = jnp.full((bs, n_tok, dst_mxlen, n_heads), -1e12, jnp.float32)
    else:
        attn = jnp.zeros((bs, n_tok, dst_mxlen, n_heads), jnp.float32)
    attn = attn.at[:, coo[:, 0], coo[:, 2], :].set(ww)
    if use_softmax:
        attn = jax.nn.softmax(attn, axis=2)
    # forward
    vw = jnp.zeros((bs, n_tok, dst_mxlen, n_heads, width), jnp.float32)
    vw = vw.at[:, coo[:, 0], coo[:, 2]].set(vf[:, coo[:, 1]])
    vo_f = jnp.einsum("bsdh,bsdhw->bshw", attn, vw)
    # backward (scatter-add into src rows)
    edge_w = attn[:, coo[:, 0], coo[:, 2], :]                 # [bs, cl, h]
    contrib = edge_w[..., None] * vb[:, coo[:, 0]]            # [bs, cl, h, w]
    vo_b = jnp.zeros((bs, n_tok, n_heads, width), jnp.float32).at[:, coo[:, 1]].add(contrib)
    return vo_f + vo_b


if __name__ == "__main__":
    key = jax.random.PRNGKey(0)
    bs, n_tok, n_heads, width = 2, 8, 2, 32
    dst_mxlen = 3

    k1, k2, k3, k4 = jax.random.split(key, 4)
    q = jax.random.normal(k1, (bs, n_tok, n_heads, width), jnp.float32)
    kk = jax.random.normal(k2, (bs, n_tok, n_heads, width), jnp.float32)
    vf = jax.random.normal(k3, (bs, n_tok, n_heads, width), jnp.float32)
    vb = jax.random.normal(k4, (bs, n_tok, n_heads, width), jnp.float32)

    # deterministic sparse connectivity: (dst, src, slot)
    coo_list = []
    for d in range(n_tok):
        coo_list.append((d, (d + 1) % n_tok, 0))
        coo_list.append((d, (d + 3) % n_tok, 1))
        if d % 2 == 0:
            coo_list.append((d, (d + 5) % n_tok, 2))
    coo = jnp.asarray(coo_list, dtype=jnp.int32)

    # ---- f32 path, softmax (approx reciprocal -> modest tolerance) ----
    vo = l1attn_sparse_bidi(vf, vb, q, kk, coo, dst_mxlen, use_softmax=True)
    jax.block_until_ready(vo)
    ref = _reference(vf, vb, q, kk, coo, dst_mxlen, True)
    assert vo.shape == (bs, n_tok, n_heads, width)
    assert jnp.allclose(vo.astype(jnp.float32), ref, atol=1e-2, rtol=1e-2)

    # ---- f32 path, no softmax (exact up to f32 accumulation) ----
    vo_ns = l1attn_sparse_bidi(vf, vb, q, kk, coo, dst_mxlen, use_softmax=False)
    jax.block_until_ready(vo_ns)
    ref_ns = _reference(vf, vb, q, kk, coo, dst_mxlen, False)
    assert jnp.allclose(vo_ns.astype(jnp.float32), ref_ns, atol=1e-4, rtol=1e-4)

    # ---- bf16 path: exercises the bf16-G / bf16-MXU fast path ----
    to_bf = lambda x: x.astype(jnp.bfloat16)
    vo_bf = l1attn_sparse_bidi(to_bf(vf), to_bf(vb), to_bf(q), to_bf(kk), coo, dst_mxlen,
                               use_softmax=True)
    jax.block_until_ready(vo_bf)
    ref_bf = _reference(to_bf(vf), to_bf(vb), to_bf(q), to_bf(kk), coo, dst_mxlen, True)
    assert vo_bf.dtype == jnp.bfloat16
    assert jnp.allclose(vo_bf.astype(jnp.float32), ref_bf, atol=0.1, rtol=0.1)

    print("KERNEL_OK")
</pallas_src>

<mosaic_0001>
module attributes {stable_mosaic.version = 11 : i64} {
  func.func @kernel(%arg0: i32, %arg1: i32, %arg2: memref<3x8x8xf32, #tpu.memory_space<vmem>>, %arg3: memref<3x8xf32, #tpu.memory_space<vmem>>, %arg4: memref<128x4xf32, #tpu.memory_space<vmem>>, %arg5: memref<1x8x128xf32, #tpu.memory_space<vmem>>, %arg6: memref<1x8x128xf32, #tpu.memory_space<vmem>>, %arg7: memref<1x8x128xf32, #tpu.memory_space<vmem>>, %arg8: memref<1x8x128xf32, #tpu.memory_space<vmem>>, %arg9: memref<1x8x128xf32, #tpu.memory_space<vmem>>) attributes {dimension_semantics = [#tpu.dimension_semantics<parallel>, #tpu.dimension_semantics<parallel>], iteration_bounds = array<i64: 2, 1>, scalar_prefetch = 0 : i64, scratch_operands = 0 : i64, tpu.core_type = #tpu.core_type<tc>, window_params = [{pipeline_mode = #tpu.pipeline_mode<synchronous>, transform_indices = @transform_0, window_bounds = array<i64: 3, 8, 8>}, {pipeline_mode = #tpu.pipeline_mode<synchronous>, transform_indices = @transform_1, window_bounds = array<i64: 3, 8>}, {pipeline_mode = #tpu.pipeline_mode<synchronous>, transform_indices = @transform_2, window_bounds = array<i64: 128, 4>}, {transform_indices = @transform_3, window_bounds = array<i64: 1, 8, 128>}, {transform_indices = @transform_4, window_bounds = array<i64: 1, 8, 128>}, {transform_indices = @transform_5, window_bounds = array<i64: 1, 8, 128>}, {transform_indices = @transform_6, window_bounds = array<i64: 1, 8, 128>}, {transform_indices = @transform_7, window_bounds = array<i64: 1, 8, 128>}]} {
    %c0 = arith.constant 0 : index
    %c0_0 = arith.constant 0 : index
    %c0_1 = arith.constant 0 : index
    %0 = vector.load %arg2[%c0, %c0_0, %c0_1] : memref<3x8x8xf32, #tpu.memory_space<vmem>>, vector<3x8x8xf32>
    %1 = vector.shape_cast %0 : vector<3x8x8xf32> to vector<24x8xf32>
    %c0_2 = arith.constant 0 : index
    %c0_3 = arith.constant 0 : index
    %2 = vector.load %arg4[%c0_2, %c0_3] : memref<128x4xf32, #tpu.memory_space<vmem>>, vector<128x4xf32>
    %c0_4 = arith.constant 0 : index
    %c0_5 = arith.constant 0 : index
    %3 = vector.load %arg3[%c0_4, %c0_5] : memref<3x8xf32, #tpu.memory_space<vmem>>, vector<3x8xf32>
    %c0_6 = arith.constant 0 : index
    %c0_7 = arith.constant 0 : index
    %c0_8 = arith.constant 0 : index
    %4 = vector.load %arg6[%c0_6, %c0_7, %c0_8] : memref<1x8x128xf32, #tpu.memory_space<vmem>>, vector<1x8x128xf32>
    %5 = vector.shape_cast %4 : vector<1x8x128xf32> to vector<8x128xf32>
    %cst = arith.constant dense<0.000000e+00> : vector<24x128xf32>
    %6 = tpu.matmul %1, %5, %cst {dimension_numbers = #tpu.dot_dimension_numbers<[1], [0], [0], [1], [0, 0, 1, 1], [], []>} : vector<24x8xf32>, vector<8x128xf32>, vector<24x128xf32> -> vector<24x128xf32>
    %c0_9 = arith.constant 0 : index
    %c0_10 = arith.constant 0 : index
    %c0_11 = arith.constant 0 : index
    %7 = vector.load %arg5[%c0_9, %c0_10, %c0_11] : memref<1x8x128xf32, #tpu.memory_space<vmem>>, vector<1x8x128xf32>
    %8 = vector.shape_cast %7 : vector<1x8x128xf32> to vector<8x128xf32>
    %9 = vector.shape_cast %6 : vector<24x128xf32> to vector<3x8x128xf32>
    %10 = vector.shape_cast %8 : vector<8x128xf32> to vector<1x8x128xf32>
    %11 = vector.broadcast %10 : vector<1x8x128xf32> to vector<3x8x128xf32>
    %12 = arith.subf %9, %11 : vector<3x8x128xf32>
    %13 = math.absf %12 : vector<3x8x128xf32>
    %14 = vector.shape_cast %13 : vector<3x8x128xf32> to vector<24x128xf32>
    %cst_12 = arith.constant dense<0.000000e+00> : vector<24x4xf32>
    %15 = tpu.matmul %14, %2, %cst_12 {dimension_numbers = #tpu.dot_dimension_numbers<[1], [0], [0], [1], [0, 0, 1, 1], [], []>} : vector<24x128xf32>, vector<128x4xf32>, vector<24x4xf32> -> vector<24x4xf32>
    %cst_13 = arith.constant -0.176776692 : f32
    %16 = vector.broadcast %cst_13 : f32 to vector<24x4xf32>
    %17 = arith.mulf %15, %16 : vector<24x4xf32>
    %18 = vector.shape_cast %17 : vector<24x4xf32> to vector<3x8x4xf32>
    %19 = vector.shape_cast %3 : vector<3x8xf32> to vector<3x8x1xf32>
    %20 = vector.broadcast %19 : vector<3x8x1xf32> to vector<3x8x4xf32>
    %21 = arith.addf %18, %20 : vector<3x8x4xf32>
    %cst_14 = arith.constant dense<0xFF800000> : vector<8x4xf32>
    %22 = vector.multi_reduction <maximumf>, %21, %cst_14 [0] : vector<3x8x4xf32> to vector<8x4xf32>
    %23 = vector.shape_cast %22 : vector<8x4xf32> to vector<1x8x4xf32>
    %24 = vector.broadcast %23 : vector<1x8x4xf32> to vector<3x8x4xf32>
    %25 = arith.subf %21, %24 : vector<3x8x4xf32>
    %26 = math.exp %25 : vector<3x8x4xf32>
    %cst_15 = arith.constant dense<0.000000e+00> : vector<8x4xf32>
    %27 = vector.multi_reduction <add>, %26, %cst_15 [0] : vector<3x8x4xf32> to vector<8x4xf32>
    %28 = vector.shape_cast %27 : vector<8x4xf32> to vector<1x8x4xf32>
    %29 = tpu.reciprocal %28 {approx = true} : vector<1x8x4xf32> -> vector<1x8x4xf32>
    %30 = vector.broadcast %29 : vector<1x8x4xf32> to vector<3x8x4xf32>
    %31 = arith.mulf %26, %30 : vector<3x8x4xf32>
    %32 = vector.shape_cast %31 : vector<3x8x4xf32> to vector<24x4xf32>
    %cst_16 = arith.constant dense<0.000000e+00> : vector<24x128xf32>
    %33 = tpu.matmul %32, %2, %cst_16 {dimension_numbers = #tpu.dot_dimension_numbers<[1], [1], [0], [0], [0, 0, 1, 0], [], []>} : vector<24x4xf32>, vector<128x4xf32>, vector<24x128xf32> -> vector<24x128xf32>
    %c0_17 = arith.constant 0 : index
    %c0_18 = arith.constant 0 : index
    %c0_19 = arith.constant 0 : index
    %34 = vector.load %arg7[%c0_17, %c0_18, %c0_19] : memref<1x8x128xf32, #tpu.memory_space<vmem>>, vector<1x8x128xf32>
    %35 = vector.shape_cast %34 : vector<1x8x128xf32> to vector<8x128xf32>
    %cst_20 = arith.constant dense<0.000000e+00> : vector<24x128xf32>
    %36 = tpu.matmul %1, %35, %cst_20 {dimension_numbers = #tpu.dot_dimension_numbers<[1], [0], [0], [1], [0, 0, 1, 1], [], []>} : vector<24x8xf32>, vector<8x128xf32>, vector<24x128xf32> -> vector<24x128xf32>
    %37 = arith.mulf %33, %36 : vector<24x128xf32>
    %38 = vector.shape_cast %37 : vector<24x128xf32> to vector<3x8x128xf32>
    %cst_21 = arith.constant dense<0.000000e+00> : vector<8x128xf32>
    %39 = vector.multi_reduction <add>, %38, %cst_21 [0] : vector<3x8x128xf32> to vector<8x128xf32>
    %40 = vector.shape_cast %33 : vector<24x128xf32> to vector<3x8x128xf32>
    %c0_22 = arith.constant 0 : index
    %c0_23 = arith.constant 0 : index
    %c0_24 = arith.constant 0 : index
    %41 = vector.load %arg8[%c0_22, %c0_23, %c0_24] : memref<1x8x128xf32, #tpu.memory_space<vmem>>, vector<1x8x128xf32>
    %42 = vector.shape_cast %41 : vector<1x8x128xf32> to vector<8x128xf32>
    %43 = vector.shape_cast %42 : vector<8x128xf32> to vector<1x8x128xf32>
    %44 = vector.broadcast %43 : vector<1x8x128xf32> to vector<3x8x128xf32>
    %45 = arith.mulf %40, %44 : vector<3x8x128xf32>
    %46 = vector.shape_cast %45 : vector<3x8x128xf32> to vector<24x128xf32>
    %cst_25 = arith.constant dense<0.000000e+00> : vector<8x128xf32>
    %47 = tpu.matmul %1, %46, %cst_25 {dimension_numbers = #tpu.dot_dimension_numbers<[0], [0], [1], [1], [0, 1, 1, 1], [], []>} : vector<24x8xf32>, vector<24x128xf32>, vector<8x128xf32> -> vector<8x128xf32>
    %48 = arith.addf %39, %47 : vector<8x128xf32>
    %c0_26 = arith.constant 0 : index
    %c0_27 = arith.constant 0 : index
    %c0_28 = arith.constant 0 : index
    %49 = vector.load %arg9[%c0_26, %c0_27, %c0_28] : memref<1x8x128xf32, #tpu.memory_space<vmem>>, vector<1x8x128xf32>
    %50 = vector.shape_cast %49 : vector<1x8x128xf32> to vector<8x128xf32>
    %51 = vector.shape_cast %48 : vector<8x128xf32> to vector<1x8x128xf32>
    tpu.vector_store %arg9[%c0_26, %c0_27, %c0_28], %51 {strides = array<i32>} : memref<1x8x128xf32, #tpu.memory_space<vmem>>, vector<1x8x128xf32>,
    return
  }
  func.func @transform_0(%arg0: i32, %arg1: i32) -> (i32, i32, i32) {
    %c0_i32 = arith.constant 0 : i32
    %c0_i32_0 = arith.constant 0 : i32
    %c0_i32_1 = arith.constant 0 : i32
    %c0_i32_2 = arith.constant 0 : i32
    return %c0_i32, %c0_i32_0, %c0_i32_1 : i32, i32, i32
  }
  func.func @transform_1(%arg0: i32, %arg1: i32) -> (i32, i32) {
    %c0_i32 = arith.constant 0 : i32
    %c0_i32_0 = arith.constant 0 : i32
    %c0_i32_1 = arith.constant 0 : i32
    return %c0_i32, %c0_i32_0 : i32, i32
  }
  func.func @transform_2(%arg0: i32, %arg1: i32) -> (i32, i32) {
    %c0_i32 = arith.constant 0 : i32
    %c0_i32_0 = arith.constant 0 : i32
    %c0_i32_1 = arith.constant 0 : i32
    return %c0_i32, %c0_i32_0 : i32, i32
  }
  func.func @transform_3(%arg0: i32, %arg1: i32) -> (i32, i32, i32) {
    %c0_i32 = arith.constant 0 : i32
    %c0_i32_0 = arith.constant 0 : i32
    return %arg0, %c0_i32, %arg1 : i32, i32, i32
  }
  func.func @transform_4(%arg0: i32, %arg1: i32) -> (i32, i32, i32) {
    %c0_i32 = arith.constant 0 : i32
    %c0_i32_0 = arith.constant 0 : i32
    return %arg0, %c0_i32, %arg1 : i32, i32, i32
  }
  func.func @transform_5(%arg0: i32, %arg1: i32) -> (i32, i32, i32) {
    %c0_i32 = arith.constant 0 : i32
    %c0_i32_0 = arith.constant 0 : i32
    return %arg0, %c0_i32, %arg1 : i32, i32, i32
  }
  func.func @transform_6(%arg0: i32, %arg1: i32) -> (i32, i32, i32) {
    %c0_i32 = arith.constant 0 : i32
    %c0_i32_0 = arith.constant 0 : i32
    return %arg0, %c0_i32, %arg1 : i32, i32, i32
  }
  func.func @transform_7(%arg0: i32, %arg1: i32) -> (i32, i32, i32) {
    %c0_i32 = arith.constant 0 : i32
    %c0_i32_0 = arith.constant 0 : i32
    return %arg0, %c0_i32, %arg1 : i32, i32, i32
  }
}

</mosaic_0001>

<llo_original>
// kernel: tpu_custom_call.1
$region0: #{tpu_custom_call.1}
  #allocation0 [shape = 'u32[]', space=smem, size = 0x4, offset = 0x4, fixed_abs, tag = 'smem constant byte address 0x4 - core index']
  #allocation1 [shape = 'u32[144,128]{1,0:T(1,128)}', space=vmem, size = 0x12000, scoped, tag = 'internal scratch']
  %s0 = inlined_call_operand.vmem [shape: f32[3,8,8], index: 0, kind: input, shape index: {}]
  %s1 = inlined_call_operand.vmem [shape: f32[3,8], index: 1, kind: input, shape index: {}]
  %s2 = inlined_call_operand.vmem [shape: f32[128,4], index: 2, kind: input, shape index: {}]
  %s3 = inlined_call_operand.vmem [shape: f32[2,8,128], index: 3, kind: input, shape index: {}]
  %s4 = inlined_call_operand.vmem [shape: f32[2,8,128], index: 4, kind: input, shape index: {}]
  %s5 = inlined_call_operand.vmem [shape: f32[2,8,128], index: 5, kind: input, shape index: {}]
  %s6 = inlined_call_operand.vmem [shape: f32[2,8,128], index: 6, kind: input, shape index: {}]
  %s7 = inlined_call_operand.hbm [shape: f32[2,8,128], index: 7, kind: output, shape index: {}]
  %s8 = sld [smem:[#allocation0]]
  $region61: #{tpu_custom_call.1} parent=0
    _
  %s10 = ssub.s32 1, %s8
  %s11 = scalar_select 0, %s10, %s8
  $region1: #{tpu_custom_call.1} parent=0
    #allocation2 [shape = 'u8[8192]{0}', space=vmem, size = 0x2000, scoped, tag = 'output window, operand 0']
    #allocation3 [shape = 's32[2]{0}', space=sflag, size = 0x8, scoped, tag = 'scoped memory for tpu_custom_call.1']
    %12 = vsyncpa [#allocation3], 0
    %s13 = scalar_lea.sflag [#allocation3], 1
    %14 = vsyncpa %s13, 0
    loop: start=0, step=1, limit=4
    $region2: #{tpu_custom_call.1} parent=1 // loop_pre_header
      _
    $region3: #{tpu_custom_call.1} parent=1 // loop_header
      %s16 = sphi 0, %s20
      %p17 = scmp.ge.s32.totalorder %s16, 4
      %s23 = sphi 0, %s35
      %s24 = sphi 0, %s31
      %s25 = sphi 0, %s23
      %s26 = sphi 0, %s24
      %s27 = sphi 0, %s25
      %s28 = sphi 0, %s26
      %s36 = sphi 0, %s36
      %s38 = sphi 0, %s36
      %s39 = sphi 0, %s38
      %s53 = sphi 0, %s39
      %s57 = sphi 0, %s57
      %s59 = sphi 0, %s57
      %s60 = sphi 0, %s59
      %s74 = sphi 0, %s60
      %s78 = sphi 0, %s78
      %s80 = sphi 0, %s78
      %s81 = sphi 0, %s80
      %s95 = sphi 0, %s81
      %s103 = sphi 0, %s105
      %s106 = sphi 0, %s103
      %s107 = sphi 0, %s106
      %s123 = sphi 0, %s107
      %s131 = sphi 0, %s133
      %s134 = sphi 0, %s131
      %s135 = sphi 0, %s134
      %s151 = sphi 0, %s135
      %s159 = sphi 0, %s161
      %s162 = sphi 0, %s159
      %s163 = sphi 0, %s162
      %s179 = sphi 0, %s163
      %s187 = sphi 0, %s189
      %s190 = sphi 0, %s187
      %s191 = sphi 0, %s190
      %s207 = sphi 0, %s191
      %s215 = sphi 0, %s217
      %s218 = sphi 0, %s215
      %s219 = sphi 0, %s218
      %s235 = sphi 0, %s219
    $region4: #{tpu_custom_call.1} parent=1 // loop_header_branch
      %19 = sbr.rel (%p17) target = $region8
    $region5: #{tpu_custom_call.1} parent=1 // loop_body
      %s21 = ssub.s32 %s16, 1
      %s22 = ssub.s32 %s16, 2
      %s29 = sadd.s32 1, %s24
      %p30 = scmp.ge.s32.totalorder %s29, 1
      %s31 = scalar_select %p30, 0, %s29
      %s32 = sadd.s32 1, %s23
      %s33 = scalar_select %p30, %s32, %s23
      %p34 = scmp.ge.s32.totalorder %s33, 2
      %s35 = scalar_select %p34, 0, %s33
      %s37 = sadd.s32 %s36, 1
      %p40 = scmp.eq.s32.totalorder %s16, 1
      %p41 = scmp.ne.s32.totalorder %s36, %s38
      %p42 = scmp.eq.s32.totalorder %s16, 0
      %p43 = por %p41, %p42
      %p44 = scmp.ne.s32.totalorder %s36, %s38
      %p45 = scmp.eq.s32.totalorder %s21, 1
      %p46 = por %p44, %p45
      %p47 = scmp.ne.s32.totalorder %s38, %s39
      %p48 = scmp.eq.s32.totalorder %s21, 0
      %p49 = por %p47, %p48
      %p50 = scmp.ne.s32.totalorder %s38, %s39
      %p51 = scmp.eq.s32.totalorder %s22, 1
      %p52 = por %p50, %p51
      %p54 = scmp.ne.s32.totalorder %s39, %s53
      %p55 = scmp.eq.s32.totalorder %s22, 0
      %p56 = por %p54, %p55
      %s58 = sadd.s32 %s57, 1
      %p61 = scmp.eq.s32.totalorder %s16, 1
      %p62 = scmp.ne.s32.totalorder %s57, %s59
      %p63 = scmp.eq.s32.totalorder %s16, 0
      %p64 = por %p62, %p63
      %p65 = scmp.ne.s32.totalorder %s57, %s59
      %p66 = scmp.eq.s32.totalorder %s21, 1
      %p67 = por %p65, %p66
      %p68 = scmp.ne.s32.totalorder %s59, %s60
      %p69 = scmp.eq.s32.totalorder %s21, 0
      %p70 = por %p68, %p69
      %p71 = scmp.ne.s32.totalorder %s59, %s60
      %p72 = scmp.eq.s32.totalorder %s22, 1
      %p73 = por %p71, %p72
      %p75 = scmp.ne.s32.totalorder %s60, %s74
      %p76 = scmp.eq.s32.totalorder %s22, 0
      %p77 = por %p75, %p76
      %s79 = sadd.s32 %s78, 1
      %p82 = scmp.eq.s32.totalorder %s16, 1
      %p83 = scmp.ne.s32.totalorder %s78, %s80
      %p84 = scmp.eq.s32.totalorder %s16, 0
      %p85 = por %p83, %p84
      %p86 = scmp.ne.s32.totalorder %s78, %s80
      %p87 = scmp.eq.s32.totalorder %s21, 1
      %p88 = por %p86, %p87
      %p89 = scmp.ne.s32.totalorder %s80, %s81
      %p90 = scmp.eq.s32.totalorder %s21, 0
      %p91 = por %p89, %p90
      %p92 = scmp.ne.s32.totalorder %s80, %s81
      %p93 = scmp.eq.s32.totalorder %s22, 1
      %p94 = por %p92, %p93
      %p96 = scmp.ne.s32.totalorder %s81, %s95
      %p97 = scmp.eq.s32.totalorder %s22, 0
      %p98 = por %p96, %p97
      %s99 = ssub.s32 %s23, %s35
      %s100 = ssub.s32 %s24, %s31
      %s101 = sor.u32 %s99, %s100
      %p102 = scmp.eq.s32.totalorder %s101, 0
      %s104 = sadd.s32 %s103, 1
      %s105 = scalar_select %p102, %s103, %s104
      %p108 = pneg %p102
      %p109 = scmp.eq.s32.totalorder %s16, 1
      %p110 = por %p108, %p109
      %p111 = scmp.ne.s32.totalorder %s103, %s106
      %p112 = scmp.eq.s32.totalorder %s16, 0
      %p113 = por %p111, %p112
      %p114 = scmp.ne.s32.totalorder %s103, %s106
      %p115 = scmp.eq.s32.totalorder %s21, 1
      %p116 = por %p114, %p115
      %p117 = scmp.ne.s32.totalorder %s106, %s107
      %p118 = scmp.eq.s32.totalorder %s21, 0
      %p119 = por %p117, %p118
      %p120 = scmp.ne.s32.totalorder %s106, %s107
      %p121 = scmp.eq.s32.totalorder %s22, 1
      %p122 = por %p120, %p121
      %p124 = scmp.ne.s32.totalorder %s107, %s123
      %p125 = scmp.eq.s32.totalorder %s22, 0
      %p126 = por %p124, %p125
      %s127 = ssub.s32 %s23, %s35
      %s128 = ssub.s32 %s24, %s31
      %s129 = sor.u32 %s127, %s128
      %p130 = scmp.eq.s32.totalorder %s129, 0
      %s132 = sadd.s32 %s131, 1
      %s133 = scalar_select %p130, %s131, %s132
      %p136 = pneg %p130
      %p137 = scmp.eq.s32.totalorder %s16, 1
      %p138 = por %p136, %p137
      %p139 = scmp.ne.s32.totalorder %s131, %s134
      %p140 = scmp.eq.s32.totalorder %s16, 0
      %p141 = por %p139, %p140
      %p142 = scmp.ne.s32.totalorder %s131, %s134
      %p143 = scmp.eq.s32.totalorder %s21, 1
      %p144 = por %p142, %p143
      %p145 = scmp.ne.s32.totalorder %s134, %s135
      %p146 = scmp.eq.s32.totalorder %s21, 0
      %p147 = por %p145, %p146
      %p148 = scmp.ne.s32.totalorder %s134, %s135
      %p149 = scmp.eq.s32.totalorder %s22, 1
      %p150 = por %p148, %p149
      %p152 = scmp.ne.s32.totalorder %s135, %s151
      %p153 = scmp.eq.s32.totalorder %s22, 0
      %p154 = por %p152, %p153
      %s155 = ssub.s32 %s23, %s35
      %s156 = ssub.s32 %s24, %s31
      %s157 = sor.u32 %s155, %s156
      %p158 = scmp.eq.s32.totalorder %s157, 0
      %s160 = sadd.s32 %s159, 1
      %s161 = scalar_select %p158, %s159, %s160
      %p164 = pneg %p158
      %p165 = scmp.eq.s32.totalorder %s16, 1
      %p166 = por %p164, %p165
      %p167 = scmp.ne.s32.totalorder %s159, %s162
      %p168 = scmp.eq.s32.totalorder %s16, 0
      %p169 = por %p167, %p168
      %p170 = scmp.ne.s32.totalorder %s159, %s162
      %p171 = scmp.eq.s32.totalorder %s21, 1
      %p172 = por %p170, %p171
      %p173 = scmp.ne.s32.totalorder %s162, %s163
      %p174 = scmp.eq.s32.totalorder %s21, 0
      %p175 = por %p173, %p174
      %p176 = scmp.ne.s32.totalorder %s162, %s163
      %p177 = scmp.eq.s32.totalorder %s22, 1
      %p178 = por %p176, %p177
      %p180 = scmp.ne.s32.totalorder %s163, %s179
      %p181 = scmp.eq.s32.totalorder %s22, 0
      %p182 = por %p180, %p181
      %s183 = ssub.s32 %s23, %s35
      %s184 = ssub.s32 %s24, %s31
      %s185 = sor.u32 %s183, %s184
      %p186 = scmp.eq.s32.totalorder %s185, 0
      %s188 = sadd.s32 %s187, 1
      %s189 = scalar_select %p186, %s187, %s188
      %p192 = pneg %p186
      %p193 = scmp.eq.s32.totalorder %s16, 1
      %p194 = por %p192, %p193
      %p195 = scmp.ne.s32.totalorder %s187, %s190
      %p196 = scmp.eq.s32.totalorder %s16, 0
      %p197 = por %p195, %p196
      %p198 = scmp.ne.s32.totalorder %s187, %s190
      %p199 = scmp.eq.s32.totalorder %s21, 1
      %p200 = por %p198, %p199
      %p201 = scmp.ne.s32.totalorder %s190, %s191
      %p202 = scmp.eq.s32.totalorder %s21, 0
      %p203 = por %p201, %p202
      %p204 = scmp.ne.s32.totalorder %s190, %s191
      %p205 = scmp.eq.s32.totalorder %s22, 1
      %p206 = por %p204, %p205
      %p208 = scmp.ne.s32.totalorder %s191, %s207
      %p209 = scmp.eq.s32.totalorder %s22, 0
      %p210 = por %p208, %p209
      %s211 = ssub.s32 %s23, %s35
      %s212 = ssub.s32 %s24, %s31
      %s213 = sor.u32 %s211, %s212
      %p214 = scmp.eq.s32.totalorder %s213, 0
      %s216 = sadd.s32 %s215, 1
      %s217 = scalar_select %p214, %s215, %s216
      %p220 = pneg %p214
      %p221 = scmp.eq.s32.totalorder %s16, 1
      %p222 = por %p220, %p221
      %p223 = scmp.ne.s32.totalorder %s215, %s218
      %p224 = scmp.eq.s32.totalorder %s16, 0
      %p225 = por %p223, %p224
      %p226 = scmp.ne.s32.totalorder %s215, %s218
      %p227 = scmp.eq.s32.totalorder %s21, 1
      %p228 = por %p226, %p227
      %p229 = scmp.ne.s32.totalorder %s218, %s219
      %p230 = scmp.eq.s32.totalorder %s21, 0
      %p231 = por %p229, %p230
      %p232 = scmp.ne.s32.totalorder %s218, %s219
      %p233 = scmp.eq.s32.totalorder %s22, 1
      %p234 = por %p232, %p233
      %p236 = scmp.ne.s32.totalorder %s219, %s235
      %p237 = scmp.eq.s32.totalorder %s22, 0
      %p238 = por %p236, %p237
      %p239 = scmp.le.s32.totalorder 1, %s16
      %p240 = scmp.lt.s32.totalorder %s16, 3
      %p241 = pnand %p239, %p240
      %p242 = pneg %p241
      // Predicated region
      $region9: #{tpu_custom_call.1} parent=5 // pred_check
        _
      $region10: #{tpu_custom_call.1} parent=5 // pred_check_branch
        %244 = sbr.rel (%p241) target = $region12
      $region11: #{tpu_custom_call.1} parent=5 // pred_region
        %s245 = ssub.s32 %s16, 1
        // Predicated region
        $region13: #{tpu_custom_call.1} parent=11 // pred_check
          %p246 = pneg %p49
        $region14: #{tpu_custom_call.1} parent=11 // pred_check_branch
          %248 = sbr.rel (%p246) target = $region16
        $region15: #{tpu_custom_call.1} parent=11 // pred_region
          _
        $region16: #{tpu_custom_call.1} parent=11 // pred_fallthru
          _
        // Predicated region
        $region17: #{tpu_custom_call.1} parent=11 // pred_check
          %p249 = pneg %p70
        $region18: #{tpu_custom_call.1} parent=11 // pred_check_branch
          %251 = sbr.rel (%p249) target = $region20
        $region19: #{tpu_custom_call.1} parent=11 // pred_region
          _
        $region20: #{tpu_custom_call.1} parent=11 // pred_fallthru
          _
        // Predicated region
        $region21: #{tpu_custom_call.1} parent=11 // pred_check
          %p252 = pneg %p91
        $region22: #{tpu_custom_call.1} parent=11 // pred_check_branch
          %254 = sbr.rel (%p252) target = $region24
        $region23: #{tpu_custom_call.1} parent=11 // pred_region
          _
        $region24: #{tpu_custom_call.1} parent=11 // pred_fallthru
          _
      $region12: #{tpu_custom_call.1} parent=5 // pred_fallthru
        _
      %p255 = scmp.lt.s32.totalorder %s16, 2
      // Predicated region
      $region25: #{tpu_custom_call.1} parent=5 // pred_check
        %p256 = pneg %p255
      $region26: #{tpu_custom_call.1} parent=5 // pred_check_branch
        %258 = sbr.rel (%p256) target = $region28
      $region27: #{tpu_custom_call.1} parent=5 // pred_region
        // Predicated region
        $region29: #{tpu_custom_call.1} parent=27 // pred_check
          %p259 = pneg %p113
        $region30: #{tpu_custom_call.1} parent=27 // pred_check_branch
          %261 = sbr.rel (%p259) target = $region32
        $region31: #{tpu_custom_call.1} parent=27 // pred_region
          %p262 = scmp.lt.s32.totalorder %s23, 1
          %s263 = scalar_select %p262, %s23, 1
          %p264 = scmp.lt.s32.totalorder %s24, 0
          %s265 = scalar_select %p264, %s24, 0
          %s266 = sadd.s32 %s265, %s263
          %s267 = smul.addr %s266, 8
          %s268 = scalar_lea.vmem %s3, %s267
        $region32: #{tpu_custom_call.1} parent=27 // pred_fallthru
          _
        // Predicated region
        $region33: #{tpu_custom_call.1} parent=27 // pred_check
          %p269 = pneg %p141
        $region34: #{tpu_custom_call.1} parent=27 // pred_check_branch
          %271 = sbr.rel (%p269) target = $region36
        $region35: #{tpu_custom_call.1} parent=27 // pred_region
          %p272 = scmp.lt.s32.totalorder %s23, 1
          %s273 = scalar_select %p272, %s23, 1
          %p274 = scmp.lt.s32.totalorder %s24, 0
          %s275 = scalar_select %p274, %s24, 0
          %s276 = sadd.s32 %s275, %s273
          %s277 = smul.addr %s276, 8
          %s278 = scalar_lea.vmem %s4, %s277
        $region36: #{tpu_custom_call.1} parent=27 // pred_fallthru
          _
        // Predicated region
        $region37: #{tpu_custom_call.1} parent=27 // pred_check
          %p279 = pneg %p169
        $region38: #{tpu_custom_call.1} parent=27 // pred_check_branch
          %281 = sbr.rel (%p279) target = $region40
        $region39: #{tpu_custom_call.1} parent=27 // pred_region
          %p282 = scmp.lt.s32.totalorder %s23, 1
          %s283 = scalar_select %p282, %s23, 1
          %p284 = scmp.lt.s32.totalorder %s24, 0
          %s285 = scalar_select %p284, %s24, 0
          %s286 = sadd.s32 %s285, %s283
          %s287 = smul.addr %s286, 8
          %s288 = scalar_lea.vmem %s5, %s287
        $region40: #{tpu_custom_call.1} parent=27 // pred_fallthru
          _
        // Predicated region
        $region41: #{tpu_custom_call.1} parent=27 // pred_check
          %p289 = pneg %p197
        $region42: #{tpu_custom_call.1} parent=27 // pred_check_branch
          %291 = sbr.rel (%p289) target = $region44
        $region43: #{tpu_custom_call.1} parent=27 // pred_region
          %p292 = scmp.lt.s32.totalorder %s23, 1
          %s293 = scalar_select %p292, %s23, 1
          %p294 = scmp.lt.s32.totalorder %s24, 0
          %s295 = scalar_select %p294, %s24, 0
          %s296 = sadd.s32 %s295, %s293
          %s297 = smul.addr %s296, 8
          %s298 = scalar_lea.vmem %s6, %s297
        $region44: #{tpu_custom_call.1} parent=27 // pred_fallthru
          _
      $region28: #{tpu_custom_call.1} parent=5 // pred_fallthru
        _
      %p299 = scmp.le.s32.totalorder 1, %s16
      %p300 = scmp.lt.s32.totalorder %s16, 3
      %p301 = pnand %p299, %p300
      %p302 = pneg %p301
      // Predicated region
      $region45: #{tpu_custom_call.1} parent=5 // pred_check
        _
      $region46: #{tpu_custom_call.1} parent=5 // pred_check_branch
        %304 = sbr.rel (%p301) target = $region48
      $region47: #{tpu_custom_call.1} parent=5 // pred_region
        %s305 = ssub.s32 %s16, 1
        %p306 = pneg %p49
        %p307 = pneg %p46
        %p308 = pneg %p70
        %p309 = pneg %p67
        %p310 = pneg %p91
        %p311 = pneg %p88
        %p312 = scmp.lt.s32.totalorder %s25, 1
        %s313 = scalar_select %p312, %s25, 1
        %p314 = scmp.lt.s32.totalorder %s26, 0
        %s315 = scalar_select %p314, %s26, 0
        %s316 = sadd.s32 %s315, %s313
        %s317 = smul.addr %s316, 8
        %s318 = scalar_lea.vmem %s3, %s317
        %p319 = pneg %p119
        %p320 = pneg %p116
        %p321 = scmp.lt.s32.totalorder %s25, 1
        %s322 = scalar_select %p321, %s25, 1
        %p323 = scmp.lt.s32.totalorder %s26, 0
        %s324 = scalar_select %p323, %s26, 0
        %s325 = sadd.s32 %s324, %s322
        %s326 = smul.addr %s325, 8
        %s327 = scalar_lea.vmem %s4, %s326
        %p328 = pneg %p147
        %p329 = pneg %p144
        %p330 = scmp.lt.s32.totalorder %s25, 1
        %s331 = scalar_select %p330, %s25, 1
        %p332 = scmp.lt.s32.totalorder %s26, 0
        %s333 = scalar_select %p332, %s26, 0
        %s334 = sadd.s32 %s333, %s331
        %s335 = smul.addr %s334, 8
        %s336 = scalar_lea.vmem %s5, %s335
        %p337 = pneg %p175
        %p338 = pneg %p172
        %p339 = scmp.lt.s32.totalorder %s25, 1
        %s340 = scalar_select %p339, %s25, 1
        %p341 = scmp.lt.s32.totalorder %s26, 0
        %s342 = scalar_select %p341, %s26, 0
        %s343 = sadd.s32 %s342, %s340
        %s344 = smul.addr %s343, 8
        %s345 = scalar_lea.vmem %s6, %s344
        %p346 = pneg %p203
        %p347 = pneg %p200
        %p348 = pneg %p231
        %p349 = pneg %p228
        %s350 = sand.u32 %s218, 1
        %s351 = scalar_lea.sflag [#allocation3], %s350
        %s352 = sand.u32 %s218, 1
        %s353 = smul.addr %s352, 8
        %s354 = scalar_lea.vmem [#allocation2], %s353
        %p355 = scmp.lt.s32.totalorder %s25, 1
        %s356 = scalar_select %p355, %s25, 1
        %p357 = scmp.lt.s32.totalorder %s26, 0
        %s358 = scalar_select %p357, %s26, 0
        %s359 = sadd.s32 %s358, %s356
        %s360 = smul.addr %s359, 8
        %s361 = scalar_lea.vmem %s3, %s360
        %p362 = scmp.lt.s32.totalorder %s25, 1
        %s363 = scalar_select %p362, %s25, 1
        %p364 = scmp.lt.s32.totalorder %s26, 0
        %s365 = scalar_select %p364, %s26, 0
        %s366 = sadd.s32 %s365, %s363
        %s367 = smul.addr %s366, 8
        %s368 = scalar_lea.vmem %s4, %s367
        %p369 = scmp.lt.s32.totalorder %s25, 1
        %s370 = scalar_select %p369, %s25, 1
        %p371 = scmp.lt.s32.totalorder %s26, 0
        %s372 = scalar_select %p371, %s26, 0
        %s373 = sadd.s32 %s372, %s370
        %s374 = smul.addr %s373, 8
        %s375 = scalar_lea.vmem %s5, %s374
        %p376 = scmp.lt.s32.totalorder %s25, 1
        %s377 = scalar_select %p376, %s25, 1
        %p378 = scmp.lt.s32.totalorder %s26, 0
        %s379 = scalar_select %p378, %s26, 0
        %s380 = sadd.s32 %s379, %s377
        %s381 = smul.addr %s380, 8
        %s382 = scalar_lea.vmem %s6, %s381
        %v383 = vld [vmem:[%s0] sm:$0xff]
        %v384 = vld [vmem:[%s0 + $0x8] sm:$0xff]
        %v385 = vld [vmem:[%s0 + $0x10] sm:$0xff]
        %v386 = vld [vmem:[%s2] sm:$0xff]
        %v387 = vld [vmem:[%s2 + $0x8] sm:$0xff]
        %v388 = vld [vmem:[%s2 + $0x10] sm:$0xff]
        %v389 = vld [vmem:[%s2 + $0x18] sm:$0xff]
        %v390 = vld [vmem:[%s2 + $0x20] sm:$0xff]
        %v391 = vld [vmem:[%s2 + $0x28] sm:$0xff]
        %v392 = vld [vmem:[%s2 + $0x30] sm:$0xff]
        %v393 = vld [vmem:[%s2 + $0x38] sm:$0xff]
        %v394 = vld [vmem:[%s2 + $0x40] sm:$0xff]
        %v395 = vld [vmem:[%s2 + $0x48] sm:$0xff]
        %v396 = vld [vmem:[%s2 + $0x50] sm:$0xff]
        %v397 = vld [vmem:[%s2 + $0x58] sm:$0xff]
        %v398 = vld [vmem:[%s2 + $0x60] sm:$0xff]
        %v399 = vld [vmem:[%s2 + $0x68] sm:$0xff]
        %v400 = vld [vmem:[%s2 + $0x70] sm:$0xff]
        %v401 = vld [vmem:[%s2 + $0x78] sm:$0xff]
        %v402 = vld [vmem:[%s1] sm:$0x7]
        %v403 = vld [vmem:[%s368] sm:$0xff]
        %vm404 = vcmask 64512
        %v406 = vsel %vm404, %v383, 0
        %v409 = vsel %vm404, %v384, 0
        %v412 = vsel %vm404, %v385, 0
        %414 = vmatprep.subr.mxu0 0.0
        %415 = vmatpush1.msra.mxu0 %v403
        %416 = vmatprep.subr.mxu0 0.0
        %417 = vmatpush1.msra.mxu0 0.0
        %418 = vmatprep.subr.mxu0 0.0
        %419 = vmatpush1.msra.mxu0 0.0
        %420 = vmatprep.subr.mxu0 0.0
        %421 = vmatpush1.msra.mxu0 0.0
        %422 = vmatprep.subr.mxu0 0.0
        %423 = vmatpush1.msra.mxu0 0.0
        %424 = vmatprep.subr.mxu0 0.0
        %425 = vmatpush1.msra.mxu0 0.0
        %426 = vmatprep.subr.mxu0 0.0
        %427 = vmatpush1.msra.mxu0 0.0
        %428 = vmatprep.subr.mxu0 0.0
        %429 = vmatpush1.msra.mxu0 0.0
        %430 = vmatprep.subr.mxu0 0.0
        %431 = vmatpush1.msra.mxu0 0.0
        %432 = vmatprep.subr.mxu0 0.0
        %433 = vmatpush1.msra.mxu0 0.0
        %434 = vmatprep.subr.mxu0 0.0
        %435 = vmatpush1.msra.mxu0 0.0
        %436 = vmatprep.subr.mxu0 0.0
        %437 = vmatpush1.msra.mxu0 0.0
        %438 = vmatprep.subr.mxu0 0.0
        %439 = vmatpush1.msra.mxu0 0.0
        %440 = vmatprep.subr.mxu0 0.0
        %441 = vmatpush1.msra.mxu0 0.0
        %442 = vmatprep.subr.mxu0 0.0
        %443 = vmatpush1.msra.mxu0 0.0
        %444 = vmatprep.subr.mxu0 0.0
        %445 = vmatpush1.msra.mxu0 0.0
        %446 = vmatprep.subr.mxu0 0.0
        %447 = vmatpush1.msra.mxu0 0.0
        %448 = vmatprep.subr.mxu0 0.0
        %449 = vmatpush1.msra.mxu0 0.0
        %450 = vmatprep.subr.mxu0 0.0
        %451 = vmatpush1.msra.mxu0 0.0
        %452 = vmatprep.subr.mxu0 0.0
        %453 = vmatpush1.msra.mxu0 0.0
        %454 = vmatprep.subr.mxu0 0.0
        %455 = vmatpush1.msra.mxu0 0.0
        %456 = vmatprep.subr.mxu0 0.0
        %457 = vmatpush1.msra.mxu0 0.0
        %458 = vmatprep.subr.mxu0 0.0
        %459 = vmatpush1.msra.mxu0 0.0
        %460 = vmatprep.subr.mxu0 0.0
        %461 = vmatpush1.msra.mxu0 0.0
        %462 = vmatprep.subr.mxu0 0.0
        %463 = vmatpush1.msra.mxu0 0.0
        %464 = vmatprep.subr.mxu0 0.0
        %465 = vmatpush1.msra.mxu0 0.0
        %466 = vmatprep.subr.mxu0 0.0
        %467 = vmatpush1.msra.mxu0 0.0
        %468 = vmatprep.subr.mxu0 0.0
        %469 = vmatpush1.msra.mxu0 0.0
        %470 = vmatprep.subr.mxu0 0.0
        %471 = vmatpush1.msra.mxu0 0.0
        %472 = vmatprep.subr.mxu0 0.0
        %473 = vmatpush1.msra.mxu0 0.0
        %474 = vmatprep.subr.mxu0 0.0
        %475 = vmatpush1.msra.mxu0 0.0
        %476 = vmatprep.subr.mxu0 0.0
        %477 = vmatpush1.msra.mxu0 0.0
        %478 = vmatprep.mubr.f32.mxu0 0.0
        %479 = vmatmul.mubr.f32.gmra.mrb[0].mxu0 %v406
        %v480 = vpop.f32.mrb[0].mxu0
        %v481 = vadd.f32 0.0, %v480
        %v482 = vpop.f32.mrb[0].mxu0
        %483 = vmatprep.mubr.f32.mxu0 0.0
        %484 = vmatmul.mubr.f32.gmra.mrb[0].mxu0 %v409
        %v485 = vpop.f32.mrb[0].mxu0
        %v486 = vadd.f32 0.0, %v485
        %v487 = vpop.f32.mrb[0].mxu0
        %488 = vmatprep.mubr.f32.mxu0 0.0
        %489 = vmatmul.mubr.f32.gmra.mrb[0].mxu0 %v412
        %v490 = vpop.f32.mrb[0].mxu0
        %v491 = vadd.f32 0.0, %v490
        %v492 = vpop.f32.mrb[0].mxu0
        %493 = vdwg.mxu0
        %v494 = vld [vmem:[%s361] sm:$0xff]
        %v495 = vsub.f32 %v481, %v494
        %v496 = vsub.f32 %v486, %v494
        %v497 = vsub.f32 %v491, %v494
        %v498 = vand.u32 2147483647, %v495
        %v499 = vand.u32 2147483647, %v496
        %v500 = vand.u32 2147483647, %v497
        %501 = vmatprep.subr.mxu0 0.0
        %502 = vmatpush1.msra.mxu0 %v386
        %503 = vmatprep.subr.mxu0 0.0
        %504 = vmatpush1.msra.mxu0 %v387
        %505 = vmatprep.subr.mxu0 0.0
        %506 = vmatpush1.msra.mxu0 %v388
        %507 = vmatprep.subr.mxu0 0.0
        %508 = vmatpush1.msra.mxu0 %v389
        %509 = vmatprep.subr.mxu0 0.0
        %510 = vmatpush1.msra.mxu0 %v390
        %511 = vmatprep.subr.mxu0 0.0
        %512 = vmatpush1.msra.mxu0 %v391
        %513 = vmatprep.subr.mxu0 0.0
        %514 = vmatpush1.msra.mxu0 %v392
        %515 = vmatprep.subr.mxu0 0.0
        %516 = vmatpush1.msra.mxu0 %v393
        %517 = vmatprep.subr.mxu0 0.0
        %518 = vmatpush1.msra.mxu0 %v394
        %519 = vmatprep.subr.mxu0 0.0
        %520 = vmatpush1.msra.mxu0 %v395
        %521 = vmatprep.subr.mxu0 0.0
        %522 = vmatpush1.msra.mxu0 %v396
        %523 = vmatprep.subr.mxu0 0.0
        %524 = vmatpush1.msra.mxu0 %v397
        %525 = vmatprep.subr.mxu0 0.0
        %526 = vmatpush1.msra.mxu0 %v398
        %527 = vmatprep.subr.mxu0 0.0
        %528 = vmatpush1.msra.mxu0 %v399
        %529 = vmatprep.subr.mxu0 0.0
        %530 = vmatpush1.msra.mxu0 %v400
        %531 = vmatprep.subr.mxu0 0.0
        %532 = vmatpush1.msra.mxu0 %v401
        %533 = vmatprep.subr.mxu0 0.0
        %534 = vmatpush1.msra.mxu0 0.0
        %535 = vmatprep.subr.mxu0 0.0
        %536 = vmatpush1.msra.mxu0 0.0
        %537 = vmatprep.subr.mxu0 0.0
        %538 = vmatpush1.msra.mxu0 0.0
        %539 = vmatprep.subr.mxu0 0.0
        %540 = vmatpush1.msra.mxu0 0.0
        %541 = vmatprep.subr.mxu0 0.0
        %542 = vmatpush1.msra.mxu0 0.0
        %543 = vmatprep.subr.mxu0 0.0
        %544 = vmatpush1.msra.mxu0 0.0
        %545 = vmatprep.subr.mxu0 0.0
        %546 = vmatpush1.msra.mxu0 0.0
        %547 = vmatprep.subr.mxu0 0.0
        %548 = vmatpush1.msra.mxu0 0.0
        %549 = vmatprep.subr.mxu0 0.0
        %550 = vmatpush1.msra.mxu0 0.0
        %551 = vmatprep.subr.mxu0 0.0
        %552 = vmatpush1.msra.mxu0 0.0
        %553 = vmatprep.subr.mxu0 0.0
        %554 = vmatpush1.msra.mxu0 0.0
        %555 = vmatprep.subr.mxu0 0.0
        %556 = vmatpush1.msra.mxu0 0.0
        %557 = vmatprep.subr.mxu0 0.0
        %558 = vmatpush1.msra.mxu0 0.0
        %559 = vmatprep.subr.mxu0 0.0
        %560 = vmatpush1.msra.mxu0 0.0
        %561 = vmatprep.subr.mxu0 0.0
        %562 = vmatpush1.msra.mxu0 0.0
        %563 = vmatprep.subr.mxu0 0.0
        %564 = vmatpush1.msra.mxu0 0.0
        %565 = vmatprep.mubr.f32.mxu0 0.0
        %566 = vmatmul.mubr.f32.gmra.mrb[0].mxu0 %v498
        %v567 = vpop.f32.mrb[0].mxu0
        %v568 = vadd.f32 0.0, %v567
        %v569 = vpop.f32.mrb[0].mxu0
        %570 = vmatprep.mubr.f32.mxu0 0.0
        %571 = vmatmul.mubr.f32.gmra.mrb[0].mxu0 %v499
        %v572 = vpop.f32.mrb[0].mxu0
        %v573 = vadd.f32 0.0, %v572
        %v574 = vpop.f32.mrb[0].mxu0
        %575 = vmatprep.mubr.f32.mxu0 0.0
        %576 = vmatmul.mubr.f32.gmra.mrb[0].mxu0 %v500
        %v577 = vpop.f32.mrb[0].mxu0
        %v578 = vadd.f32 0.0, %v577
        %v579 = vpop.f32.mrb[0].mxu0
        %580 = vdwg.mxu0
        %v581 = vmul.f32 %v568, -0.17677669
        %v582 = vmul.f32 %v573, -0.17677669
        %v583 = vmul.f32 %v578, -0.17677669
        %v584 = vlaneseq
        %v585 = vshrl.u32 %v584, 7
        %v586 = vsub.s32 0, %v585
        %v587 = vrot.slane %v402, %v586
        %589 = vbcast.lane.b32.xlu0 %v587, 256
        %v590 = vpop.permute.xlu0 %589
        %v591 = vlaneseq
        %v592 = vshrl.u32 %v591, 7
        %v593 = vsub.s32 1, %v592
        %v594 = vrot.slane %v402, %v593
        %596 = vbcast.lane.b32.xlu0 %v594, 256
        %v597 = vpop.permute.xlu0 %596
        %v598 = vlaneseq
        %v599 = vshrl.u32 %v598, 7
        %v600 = vsub.s32 2, %v599
        %v601 = vrot.slane %v402, %v600
        %603 = vbcast.lane.b32.xlu0 %v601, 256
        %v604 = vpop.permute.xlu0 %603
        %v605 = vadd.f32 %v581, %v590
        %v606 = vadd.f32 %v582, %v597
        %v607 = vadd.f32 %v583, %v604
        %vm608 = vcmask 31744
        %v609 = vsel %vm608, %v605, -inf
        %v610 = vsel %vm608, %v606, -inf
        %v611 = vsel %vm608, %v607, -inf
        %v612 = vmax.f32 %v609, %v610
        %v613 = vmax.f32 %v612, %v611
        %v614 = vsub.f32 %v605, %v613
        %v615 = vsub.f32 %v606, %v613
        %v616 = vsub.f32 %v607, %v613
        %v617 = vmul.f32 %v614, 1.442695
        %v618 = vpow.pop %v617
        %v619 = vmul.f32 %v615, 1.442695
        %v620 = vpow.pop %v619
        %v621 = vmul.f32 %v616, 1.442695
        %v622 = vpow.pop %v621
        %v623 = vsel %vm608, %v618, 0.0
        %v624 = vsel %vm608, %v620, 0.0
        %v625 = vadd.f32 %v623, %v624
        %v626 = vsel %vm608, %v622, 0.0
        %v627 = vadd.f32 %v625, %v626
        %v628 = vrcp.pop %v627
        %v629 = vmul.f32 %v618, %v628
        %v630 = vmul.f32 %v620, %v628
        %v631 = vmul.f32 %v622, %v628
        %v633 = vsel %vm608, %v629, 0
        %v636 = vsel %vm608, %v630, 0
        %v639 = vsel %vm608, %v631, 0
        %v642 = vsel %vm608, %v386, 0
        %v645 = vsel %vm608, %v387, 0
        %v648 = vsel %vm608, %v388, 0
        %v651 = vsel %vm608, %v389, 0
        %v654 = vsel %vm608, %v390, 0
        %v657 = vsel %vm608, %v391, 0
        %v660 = vsel %vm608, %v392, 0
        %v663 = vsel %vm608, %v393, 0
        %v666 = vsel %vm608, %v394, 0
        %v669 = vsel %vm608, %v395, 0
        %v672 = vsel %vm608, %v396, 0
        %v675 = vsel %vm608, %v397, 0
        %v678 = vsel %vm608, %v398, 0
        %v681 = vsel %vm608, %v399, 0
        %v684 = vsel %vm608, %v400, 0
        %v687 = vsel %vm608, %v401, 0
        %689 = vmatprep.subr.mxu0 0.0
        %690 = vmatpush1.xpose.msra.mxu0 %v642
        %691 = vmatprep.subr.mxu0 0.0
        %692 = vmatpush1.xpose.msra.mxu0 %v645
        %693 = vmatprep.subr.mxu0 0.0
        %694 = vmatpush1.xpose.msra.mxu0 %v648
        %695 = vmatprep.subr.mxu0 0.0
        %696 = vmatpush1.xpose.msra.mxu0 %v651
        %697 = vmatprep.subr.mxu0 0.0
        %698 = vmatpush1.xpose.msra.mxu0 %v654
        %699 = vmatprep.subr.mxu0 0.0
        %700 = vmatpush1.xpose.msra.mxu0 %v657
        %701 = vmatprep.subr.mxu0 0.0
        %702 = vmatpush1.xpose.msra.mxu0 %v660
        %703 = vmatprep.subr.mxu0 0.0
        %704 = vmatpush1.xpose.msra.mxu0 %v663
        %705 = vmatprep.subr.mxu0 0.0
        %706 = vmatpush1.xpose.msra.mxu0 %v666
        %707 = vmatprep.subr.mxu0 0.0
        %708 = vmatpush1.xpose.msra.mxu0 %v669
        %709 = vmatprep.subr.mxu0 0.0
        %710 = vmatpush1.xpose.msra.mxu0 %v672
        %711 = vmatprep.subr.mxu0 0.0
        %712 = vmatpush1.xpose.msra.mxu0 %v675
        %713 = vmatprep.subr.mxu0 0.0
        %714 = vmatpush1.xpose.msra.mxu0 %v678
        %715 = vmatprep.subr.mxu0 0.0
        %716 = vmatpush1.xpose.msra.mxu0 %v681
        %717 = vmatprep.subr.mxu0 0.0
        %718 = vmatpush1.xpose.msra.mxu0 %v684
        %719 = vmatprep.subr.mxu0 0.0
        %720 = vmatpush1.xpose.msra.mxu0 %v687
        %721 = vmatprep.subr.mxu0 0.0
        %722 = vmatpush1.xpose.msra.mxu0 0.0
        %723 = vmatprep.subr.mxu0 0.0
        %724 = vmatpush1.xpose.msra.mxu0 0.0
        %725 = vmatprep.subr.mxu0 0.0
        %726 = vmatpush1.xpose.msra.mxu0 0.0
        %727 = vmatprep.subr.mxu0 0.0
        %728 = vmatpush1.xpose.msra.mxu0 0.0
        %729 = vmatprep.subr.mxu0 0.0
        %730 = vmatpush1.xpose.msra.mxu0 0.0
        %731 = vmatprep.subr.mxu0 0.0
        %732 = vmatpush1.xpose.msra.mxu0 0.0
        %733 = vmatprep.subr.mxu0 0.0
        %734 = vmatpush1.xpose.msra.mxu0 0.0
        %735 = vmatprep.subr.mxu0 0.0
        %736 = vmatpush1.xpose.msra.mxu0 0.0
        %737 = vmatprep.subr.mxu0 0.0
        %738 = vmatpush1.xpose.msra.mxu0 0.0
        %739 = vmatprep.subr.mxu0 0.0
        %740 = vmatpush1.xpose.msra.mxu0 0.0
        %741 = vmatprep.subr.mxu0 0.0
        %742 = vmatpush1.xpose.msra.mxu0 0.0
        %743 = vmatprep.subr.mxu0 0.0
        %744 = vmatpush1.xpose.msra.mxu0 0.0
        %745 = vmatprep.subr.mxu0 0.0
        %746 = vmatpush1.xpose.msra.mxu0 0.0
        %747 = vmatprep.subr.mxu0 0.0
        %748 = vmatpush1.xpose.msra.mxu0 0.0
        %749 = vmatprep.subr.mxu0 0.0
        %750 = vmatpush1.xpose.msra.mxu0 0.0
        %751 = vmatprep.subr.mxu0 0.0
        %752 = vmatpush1.xpose.msra.mxu0 0.0
        %753 = vmatprep.mubr.f32.mxu0 0.0
        %754 = vmatmul.mubr.f32.gmra.mrb[0].mxu0 %v633
        %v755 = vpop.f32.mrb[0].mxu0
        %v756 = vadd.f32 0.0, %v755
        %v757 = vpop.f32.mrb[0].mxu0
        %758 = vmatprep.mubr.f32.mxu0 0.0
        %759 = vmatmul.mubr.f32.gmra.mrb[0].mxu0 %v636
        %v760 = vpop.f32.mrb[0].mxu0
        %v761 = vadd.f32 0.0, %v760
        %v762 = vpop.f32.mrb[0].mxu0
        %763 = vmatprep.mubr.f32.mxu0 0.0
        %764 = vmatmul.mubr.f32.gmra.mrb[0].mxu0 %v639
        %v765 = vpop.f32.mrb[0].mxu0
        %v766 = vadd.f32 0.0, %v765
        %v767 = vpop.f32.mrb[0].mxu0
        %768 = vdwg.mxu0
        %v769 = vld [vmem:[%s375] sm:$0xff]
        %770 = vmatprep.subr.mxu0 0.0
        %771 = vmatpush1.msra.mxu0 %v769
        %772 = vmatprep.subr.mxu0 0.0
        %773 = vmatpush1.msra.mxu0 0.0
        %774 = vmatprep.subr.mxu0 0.0
        %775 = vmatpush1.msra.mxu0 0.0
        %776 = vmatprep.subr.mxu0 0.0
        %777 = vmatpush1.msra.mxu0 0.0
        %778 = vmatprep.subr.mxu0 0.0
        %779 = vmatpush1.msra.mxu0 0.0
        %780 = vmatprep.subr.mxu0 0.0
        %781 = vmatpush1.msra.mxu0 0.0
        %782 = vmatprep.subr.mxu0 0.0
        %783 = vmatpush1.msra.mxu0 0.0
        %784 = vmatprep.subr.mxu0 0.0
        %785 = vmatpush1.msra.mxu0 0.0
        %786 = vmatprep.subr.mxu0 0.0
        %787 = vmatpush1.msra.mxu0 0.0
        %788 = vmatprep.subr.mxu0 0.0
        %789 = vmatpush1.msra.mxu0 0.0
        %790 = vmatprep.subr.mxu0 0.0
        %791 = vmatpush1.msra.mxu0 0.0
        %792 = vmatprep.subr.mxu0 0.0
        %793 = vmatpush1.msra.mxu0 0.0
        %794 = vmatprep.subr.mxu0 0.0
        %795 = vmatpush1.msra.mxu0 0.0
        %796 = vmatprep.subr.mxu0 0.0
        %797 = vmatpush1.msra.mxu0 0.0
        %798 = vmatprep.subr.mxu0 0.0
        %799 = vmatpush1.msra.mxu0 0.0
        %800 = vmatprep.subr.mxu0 0.0
        %801 = vmatpush1.msra.mxu0 0.0
        %802 = vmatprep.subr.mxu0 0.0
        %803 = vmatpush1.msra.mxu0 0.0
        %804 = vmatprep.subr.mxu0 0.0
        %805 = vmatpush1.msra.mxu0 0.0
        %806 = vmatprep.subr.mxu0 0.0
        %807 = vmatpush1.msra.mxu0 0.0
        %808 = vmatprep.subr.mxu0 0.0
        %809 = vmatpush1.msra.mxu0 0.0
        %810 = vmatprep.subr.mxu0 0.0
        %811 = vmatpush1.msra.mxu0 0.0
        %812 = vmatprep.subr.mxu0 0.0
        %813 = vmatpush1.msra.mxu0 0.0
        %814 = vmatprep.subr.mxu0 0.0
        %815 = vmatpush1.msra.mxu0 0.0
        %816 = vmatprep.subr.mxu0 0.0
        %817 = vmatpush1.msra.mxu0 0.0
        %818 = vmatprep.subr.mxu0 0.0
        %819 = vmatpush1.msra.mxu0 0.0
        %820 = vmatprep.subr.mxu0 0.0
        %821 = vmatpush1.msra.mxu0 0.0
        %822 = vmatprep.subr.mxu0 0.0
        %823 = vmatpush1.msra.mxu0 0.0
        %824 = vmatprep.subr.mxu0 0.0
        %825 = vmatpush1.msra.mxu0 0.0
        %826 = vmatprep.subr.mxu0 0.0
        %827 = vmatpush1.msra.mxu0 0.0
        %828 = vmatprep.subr.mxu0 0.0
        %829 = vmatpush1.msra.mxu0 0.0
        %830 = vmatprep.subr.mxu0 0.0
        %831 = vmatpush1.msra.mxu0 0.0
        %832 = vmatprep.subr.mxu0 0.0
        %833 = vmatpush1.msra.mxu0 0.0
        %834 = vmatprep.mubr.f32.mxu0 0.0
        %835 = vmatmul.mubr.f32.gmra.mrb[0].mxu0 %v406
        %v836 = vpop.f32.mrb[0].mxu0
        %v837 = vadd.f32 0.0, %v836
        %v838 = vpop.f32.mrb[0].mxu0
        %839 = vmatprep.mubr.f32.mxu0 0.0
        %840 = vmatmul.mubr.f32.gmra.mrb[0].mxu0 %v409
        %v841 = vpop.f32.mrb[0].mxu0
        %v842 = vadd.f32 0.0, %v841
        %v843 = vpop.f32.mrb[0].mxu0
        %844 = vmatprep.mubr.f32.mxu0 0.0
        %845 = vmatmul.mubr.f32.gmra.mrb[0].mxu0 %v412
        %v846 = vpop.f32.mrb[0].mxu0
        %v847 = vadd.f32 0.0, %v846
        %v848 = vpop.f32.mrb[0].mxu0
        %849 = vdwg.mxu0
        %v850 = vmul.f32 %v756, %v837
        %v851 = vmul.f32 %v761, %v842
        %v852 = vmul.f32 %v766, %v847
        %v853 = vadd.f32 %v850, %v851
        %v854 = vadd.f32 %v853, %v852
        %v855 = vld [vmem:[%s382] sm:$0xff]
        %v856 = vmul.f32 %v756, %v855
        %v857 = vmul.f32 %v761, %v855
        %v858 = vmul.f32 %v766, %v855
        %859 = vxpose.xlu0.b32.start [1/16] %v383, 128
        %860 = vxpose.xlu0.b32.cont [2/16] %v384, 128
        %861 = vxpose.xlu0.b32.cont [3/16] %v385, 128
        %862 = vxpose.xlu0.b32.cont [4/16] 0.0, 128
        %863 = vxpose.xlu0.b32.cont [5/16] 0.0, 128
        %864 = vxpose.xlu0.b32.cont [6/16] 0.0, 128
        %865 = vxpose.xlu0.b32.cont [7/16] 0.0, 128
        %866 = vxpose.xlu0.b32.cont [8/16] 0.0, 128
        %867 = vxpose.xlu0.b32.cont [9/16] 0.0, 128
        %868 = vxpose.xlu0.b32.cont [10/16] 0.0, 128
        %869 = vxpose.xlu0.b32.cont [11/16] 0.0, 128
        %870 = vxpose.xlu0.b32.cont [12/16] 0.0, 128
        %871 = vxpose.xlu0.b32.cont [13/16] 0.0, 128
        %872 = vxpose.xlu0.b32.cont [14/16] 0.0, 128
        %873 = vxpose.xlu0.b32.cont [15/16] 0.0, 128
        %874 = vxpose.xlu0.b32.end [16/16] 0.0, 128
        %v875 = vpop.trf.xlu0
        %v876 = vpop.trf.xlu0
        %v877 = vpop.trf.xlu0
        %v878 = vpop.trf.xlu0
        %v879 = vpop.trf.xlu0
        %v880 = vpop.trf.xlu0
        %v881 = vpop.trf.xlu0
        %v882 = vpop.trf.xlu0
        %v883 = vpop.trf.xlu0
        %v884 = vpop.trf.xlu0
        %v885 = vpop.trf.xlu0
        %v886 = vpop.trf.xlu0
        %v887 = vpop.trf.xlu0
        %v888 = vpop.trf.xlu0
        %v889 = vpop.trf.xlu0
        %v890 = vpop.trf.xlu0
        %vm891 = vcmask 195584
        %v893 = vsel %vm891, %v875, 0
        %895 = vmatprep.subr.mxu0 0.0
        %896 = vmatpush1.msra.mxu0 %v856
        %897 = vmatprep.subr.mxu0 0.0
        %898 = vmatpush1.msra.mxu0 %v857
        %899 = vmatprep.subr.mxu0 0.0
        %900 = vmatpush1.msra.mxu0 %v858
        %901 = vmatprep.subr.mxu0 0.0
        %902 = vmatpush1.msra.mxu0 0.0
        %903 = vmatprep.subr.mxu0 0.0
        %904 = vmatpush1.msra.mxu0 0.0
        %905 = vmatprep.subr.mxu0 0.0
        %906 = vmatpush1.msra.mxu0 0.0
        %907 = vmatprep.subr.mxu0 0.0
        %908 = vmatpush1.msra.mxu0 0.0
        %909 = vmatprep.subr.mxu0 0.0
        %910 = vmatpush1.msra.mxu0 0.0
        %911 = vmatprep.subr.mxu0 0.0
        %912 = vmatpush1.msra.mxu0 0.0
        %913 = vmatprep.subr.mxu0 0.0
        %914 = vmatpush1.msra.mxu0 0.0
        %915 = vmatprep.subr.mxu0 0.0
        %916 = vmatpush1.msra.mxu0 0.0
        %917 = vmatprep.subr.mxu0 0.0
        %918 = vmatpush1.msra.mxu0 0.0
        %919 = vmatprep.subr.mxu0 0.0
        %920 = vmatpush1.msra.mxu0 0.0
        %921 = vmatprep.subr.mxu0 0.0
        %922 = vmatpush1.msra.mxu0 0.0
        %923 = vmatprep.subr.mxu0 0.0
        %924 = vmatpush1.msra.mxu0 0.0
        %925 = vmatprep.subr.mxu0 0.0
        %926 = vmatpush1.msra.mxu0 0.0
        %927 = vmatprep.subr.mxu0 0.0
        %928 = vmatpush1.msra.mxu0 0.0
        %929 = vmatprep.subr.mxu0 0.0
        %930 = vmatpush1.msra.mxu0 0.0
        %931 = vmatprep.subr.mxu0 0.0
        %932 = vmatpush1.msra.mxu0 0.0
        %933 = vmatprep.subr.mxu0 0.0
        %934 = vmatpush1.msra.mxu0 0.0
        %935 = vmatprep.subr.mxu0 0.0
        %936 = vmatpush1.msra.mxu0 0.0
        %937 = vmatprep.subr.mxu0 0.0
        %938 = vmatpush1.msra.mxu0 0.0
        %939 = vmatprep.subr.mxu0 0.0
        %940 = vmatpush1.msra.mxu0 0.0
        %941 = vmatprep.subr.mxu0 0.0
        %942 = vmatpush1.msra.mxu0 0.0
        %943 = vmatprep.subr.mxu0 0.0
        %944 = vmatpush1.msra.mxu0 0.0
        %945 = vmatprep.subr.mxu0 0.0
        %946 = vmatpush1.msra.mxu0 0.0
        %947 = vmatprep.subr.mxu0 0.0
        %948 = vmatpush1.msra.mxu0 0.0
        %949 = vmatprep.subr.mxu0 0.0
        %950 = vmatpush1.msra.mxu0 0.0
        %951 = vmatprep.subr.mxu0 0.0
        %952 = vmatpush1.msra.mxu0 0.0
        %953 = vmatprep.subr.mxu0 0.0
        %954 = vmatpush1.msra.mxu0 0.0
        %955 = vmatprep.subr.mxu0 0.0
        %956 = vmatpush1.msra.mxu0 0.0
        %957 = vmatprep.subr.mxu0 0.0
        %958 = vmatpush1.msra.mxu0 0.0
        %959 = vmatprep.mubr.f32.mxu0 0.0
        %960 = vmatmul.mubr.f32.gmra.mrb[0].mxu0 %v893
        %v961 = vpop.f32.mrb[0].mxu0
        %v962 = vadd.f32 0.0, %v961
        %v963 = vpop.f32.mrb[0].mxu0
        %964 = vdwg.mxu0
        %v965 = vadd.f32 %v854, %v962
        %966 = vst [vmem:[%s354] sm:$0xff] %v965
        %s967 = sand.u32 %s218, 1
        %s968 = scalar_lea.sflag [#allocation3], %s967
        %s969 = sand.u32 %s218, 1
        %s970 = smul.addr %s969, 8
        %s971 = scalar_lea.vmem [#allocation2], %s970
        // Predicated region
        $region49: #{tpu_custom_call.1} parent=47 // pred_check
          %p972 = pneg %p228
        $region50: #{tpu_custom_call.1} parent=47 // pred_check_branch
          %974 = sbr.rel (%p972) target = $region52
        $region51: #{tpu_custom_call.1} parent=47 // pred_region
          %s976 = ssub.s32 128, 128
          %977 = vsyncadd %s968, %s976
          %s978 = sadd.s32 %s26, %s25
          %s979 = smul.addr %s978, 128
          %s980 = scalar_lea.hbm %s7, %s979
          %s982 = sshll.u32 %s971, 4
          %s983 = int_to_ptr.vmem [resolvable:$true] %s982
          %985 = dma.vmem_to_hbm [thread:$0]  %s983, 128, %s980, %s968
        $region52: #{tpu_custom_call.1} parent=47 // pred_fallthru
          _
      $region48: #{tpu_custom_call.1} parent=5 // pred_fallthru
        _
      %p986 = scmp.le.s32.totalorder 2, %s16
      // Predicated region
      $region53: #{tpu_custom_call.1} parent=5 // pred_check
        %p987 = pneg %p986
      $region54: #{tpu_custom_call.1} parent=5 // pred_check_branch
        %989 = sbr.rel (%p987) target = $region56
      $region55: #{tpu_custom_call.1} parent=5 // pred_region
        %s990 = ssub.s32 %s16, 2
        // Predicated region
        $region57: #{tpu_custom_call.1} parent=55 // pred_check
          %p991 = pneg %p234
        $region58: #{tpu_custom_call.1} parent=55 // pred_check_branch
          %993 = sbr.rel (%p991) target = $region60
        $region59: #{tpu_custom_call.1} parent=55 // pred_region
          %s994 = sand.u32 %s219, 1
          %s995 = scalar_lea.sflag [#allocation3], %s994
          %s996 = sand.u32 %s219, 1
          %s997 = smul.addr %s996, 8
          %s998 = scalar_lea.vmem [#allocation2], %s997
          %999 = dma.done %s995, 128
        $region60: #{tpu_custom_call.1} parent=55 // pred_fallthru
          _
      $region56: #{tpu_custom_call.1} parent=5 // pred_fallthru
        _
    $region6: #{tpu_custom_call.1} parent=1 // loop_footer
      %s20 = sadd.s32 1, %s16
    $region7: #{tpu_custom_call.1} parent=1 // loop_footer_branch
      %15 = sbr.rel target = $region3
    $region8: #{tpu_custom_call.1} parent=1 // loop_exit
      _
    %1000 = vsyncpa [#allocation3], 1
    %s1001 = scalar_lea.sflag [#allocation3], 1
    %1002 = vsyncpa %s1001, 1

</llo_original>
